<compile_context>
chip_gen: v5e
topology: v5e:2x2
jax: 0.10.0
libtpu: 0.0.40
codegen_flags: <defaults>
</compile_context>

<pallas_src>
import functools
import math

import jax
import jax.numpy as jnp
from jax.experimental import pallas as pl
from jax.experimental.pallas import tpu as pltpu


def _sinusoid_kernel(scale_k_ref, bias0_ref, out_ref, *, tn):
    # scale_k_ref: (1, W) f32, value = k * inv_freq[(lane % dim) % half]
    # bias0_ref:   (1, W) f32, value = (lane // dim) * inv_freq[(lane % dim) % half]
    # out_ref:     (TN, W) f32 packed output block; packed row r, lane l <-> t = r*k + l//dim.
    i = pl.program_id(0)
    rows, width = out_ref.shape
    # Per-block (1, W) bias row, computed once per grid step (negligible vs per-element work):
    #   bias = ((i*tn)*k + lane//dim) * inv_freq  ==  (i*tn) * scale_k + bias0
    base = (i * tn).astype(jnp.float32)
    bias = base * scale_k_ref[...] + bias0_ref[...]
    # Per-element chain: iota -> cast -> fmul -> fadd (4 VPU ops per vreg).
    local = jax.lax.broadcasted_iota(jnp.int32, (rows, width), 0).astype(jnp.float32)
    out_ref[...] = local * scale_k_ref[...] + bias


def make_inv_freq(dim: int) -> jnp.ndarray:
    # Deterministic "parameter" (buffer) identical to the PyTorch __init__.
    exponents = jnp.arange(0, dim, 2, dtype=jnp.float32) / dim
    return 1.0 / (10000.0 ** exponents)  # (dim//2,)


def _choose_row_block(rows: int, w: int) -> int:
    # ~8 MiB per output block (double-buffered -> ~16 MiB, under the explicit 48 MiB VMEM limit),
    # amortizing the ~0.35 us per-grid-step overhead to <5% for large n.
    tn_cap = max(8, ((8 * 1024 * 1024) // (w * 4)) // 8 * 8)
    if rows <= tn_cap:
        # Prefer an even 2-block split (multiple-of-8 halves) so v7x's two TCs share writeback;
        # otherwise a single full-extent block (always legal w.r.t. the (8,128) rule).
        if rows >= 16 and rows % 16 == 0:
            return rows // 2
        return rows
    nblocks = -(-rows // tn_cap)
    if nblocks % 2:
        nblocks += 1                      # even grid count for v7x's 2 TensorCores
    tn = -(-rows // nblocks)
    return ((tn + 7) // 8) * 8            # multiple of 8 sublanes


def sinusoidal_embeddings(x: jnp.ndarray, inv_freq: jnp.ndarray) -> jnp.ndarray:
    """x: (..., n, d_any). Returns (n, dim) f32 with dim = 2 * inv_freq.shape[0]."""
    n = x.shape[-2]
    half = int(inv_freq.shape[0])
    dim = 2 * half
    assert dim > 0

    # Lane-dense packing: fold k logical rows per packed row so the packed width w = k*dim is
    # always a multiple of 128 (full unmasked vst for any even dim) and ~512 lanes wide for
    # long contiguous DMA rows.  k is always a power of two; n not divisible by k is handled
    # by padding rows and slicing the final reshape.
    base_k = math.lcm(dim, 128) // dim
    mult = max(1, 512 // (base_k * dim))
    k = base_k * mult
    w = k * dim
    rows = -(-n // k)                      # padded packed-row count

    # Tiny per-lane tables (trace-time glue; 2 * w * 4 bytes).
    lane = jnp.arange(w, dtype=jnp.int32)
    off = lane // dim                      # which of the k folded logical rows this lane is
    j = (lane % dim) % half                # column into inv_freq (duplicated halves)
    inv_lane = inv_freq.astype(jnp.float32)[j]
    scale_k = (float(k) * inv_lane).reshape(1, w)                 # k * inv_freq (exact: k is 2^m)
    bias0 = (off.astype(jnp.float32) * inv_lane).reshape(1, w)    # (lane//dim) * inv_freq

    tn = _choose_row_block(rows, w)
    grid = (-(-rows // tn),)

    kernel = functools.partial(_sinusoid_kernel, tn=tn)
    out_packed = pl.pallas_call(
        kernel,
        out_shape=jax.ShapeDtypeStruct((rows, w), jnp.float32),
        grid=grid,
        in_specs=[
            pl.BlockSpec((1, w), lambda i: (0, 0)),
            pl.BlockSpec((1, w), lambda i: (0, 0)),
        ],
        out_specs=pl.BlockSpec((tn, w), lambda i: (i, 0)),
        compiler_params=pltpu.CompilerParams(
            dimension_semantics=("parallel",),
            vmem_limit_bytes=48 * 1024 * 1024,
        ),
    )(scale_k, bias0)

    # Row-major reshape back to the logical layout; slice off padded rows if n % k != 0.
    out = out_packed.reshape(rows * k, dim)
    if rows * k != n:
        out = out[:n]
    return out


def _reference(x: jnp.ndarray, inv_freq: jnp.ndarray) -> jnp.ndarray:
    n = x.shape[-2]
    t = jnp.arange(n, dtype=inv_freq.dtype)
    freqs = jnp.einsum("i,j->ij", t, inv_freq)
    return jnp.concatenate([freqs, freqs], axis=-1)


if __name__ == "__main__":
    key = jax.random.PRNGKey(0)

    # Small shapes consistent with the module's forward.
    batch, seq, dim = 2, 8, 32
    x = jax.random.normal(key, (batch, seq, dim), dtype=jnp.float32)
    inv_freq = make_inv_freq(dim)
    out = jax.block_until_ready(sinusoidal_embeddings(x, inv_freq))
    ref = _reference(x, inv_freq)
    assert out.shape == (seq, dim), out.shape
    assert jnp.allclose(out, ref, atol=1e-6, rtol=1e-6), "mismatch vs reference (small)"

    # Secondary check exercising the even-grid tiled path (still small: ~0.6 MB).
    seq2, dim2 = 2304, 64
    x2 = jax.random.normal(key, (1, seq2, dim2), dtype=jnp.float32)
    inv_freq2 = make_inv_freq(dim2)
    out2 = jax.block_until_ready(sinusoidal_embeddings(x2, inv_freq2))
    ref2 = _reference(x2, inv_freq2)
    assert out2.shape == (seq2, dim2), out2.shape
    assert jnp.allclose(out2, ref2, atol=1e-6, rtol=1e-6), "mismatch vs reference (tiled)"

    # Third check: n not a multiple of the packing factor k (padded rows + final slice).
    seq3, dim3 = 10, 32
    x3 = jax.random.normal(key, (1, seq3, dim3), dtype=jnp.float32)
    inv_freq3 = make_inv_freq(dim3)
    out3 = jax.block_until_ready(sinusoidal_embeddings(x3, inv_freq3))
    ref3 = _reference(x3, inv_freq3)
    assert out3.shape == (seq3, dim3), out3.shape
    assert jnp.allclose(out3, ref3, atol=1e-6, rtol=1e-6), "mismatch vs reference (padded)"

    print("KERNEL_OK")
</pallas_src>

<mosaic_0001>
module attributes {stable_mosaic.version = 11 : i64} {
  func.func @_sinusoid_kernel(%arg0: i32, %arg1: memref<1x512xf32, #tpu.memory_space<vmem>>, %arg2: memref<1x512xf32, #tpu.memory_space<vmem>>, %arg3: memref<1x512xf32, #tpu.memory_space<vmem>>) attributes {dimension_semantics = [#tpu.dimension_semantics<parallel>], iteration_bounds = array<i64: 1>, scalar_prefetch = 0 : i64, scratch_operands = 0 : i64, tpu.core_type = #tpu.core_type<tc>, window_params = [{pipeline_mode = #tpu.pipeline_mode<synchronous>, transform_indices = @transform_0, window_bounds = array<i64: 1, 512>}, {pipeline_mode = #tpu.pipeline_mode<synchronous>, transform_indices = @transform_1, window_bounds = array<i64: 1, 512>}, {transform_indices = @transform_2, window_bounds = array<i64: 1, 512>}]} {
    %c1_i32 = arith.constant 1 : i32
    %0 = arith.muli %arg0, %c1_i32 : i32
    %1 = arith.sitofp %0 : i32 to f32
    %c0 = arith.constant 0 : index
    %c0_0 = arith.constant 0 : index
    %2 = vector.load %arg1[%c0, %c0_0] : memref<1x512xf32, #tpu.memory_space<vmem>>, vector<1x512xf32>
    %3 = vector.broadcast %1 : f32 to vector<1x512xf32>
    %4 = arith.mulf %3, %2 : vector<1x512xf32>
    %c0_1 = arith.constant 0 : index
    %c0_2 = arith.constant 0 : index
    %5 = vector.load %arg2[%c0_1, %c0_2] : memref<1x512xf32, #tpu.memory_space<vmem>>, vector<1x512xf32>
    %6 = arith.addf %4, %5 : vector<1x512xf32>
    %7 = tpu.iota {dimensions = array<i32: 0>} : vector<1x512xi32>
    %8 = arith.sitofp %7 : vector<1x512xi32> to vector<1x512xf32>
    %c0_3 = arith.constant 0 : index
    %c0_4 = arith.constant 0 : index
    %9 = vector.load %arg1[%c0_3, %c0_4] : memref<1x512xf32, #tpu.memory_space<vmem>>, vector<1x512xf32>
    %10 = arith.mulf %8, %9 : vector<1x512xf32>
    %11 = arith.addf %10, %6 : vector<1x512xf32>
    %c0_5 = arith.constant 0 : index
    %c0_6 = arith.constant 0 : index
    %12 = vector.load %arg3[%c0_5, %c0_6] : memref<1x512xf32, #tpu.memory_space<vmem>>, vector<1x512xf32>
    tpu.vector_store %arg3[%c0_5, %c0_6], %11 {strides = array<i32>} : memref<1x512xf32, #tpu.memory_space<vmem>>, vector<1x512xf32>,
    return
  }
  func.func @transform_0(%arg0: i32) -> (i32, i32) {
    %c0_i32 = arith.constant 0 : i32
    %c0_i32_0 = arith.constant 0 : i32
    %c0_i32_1 = arith.constant 0 : i32
    return %c0_i32, %c0_i32_0 : i32, i32
  }
  func.func @transform_1(%arg0: i32) -> (i32, i32) {
    %c0_i32 = arith.constant 0 : i32
    %c0_i32_0 = arith.constant 0 : i32
    %c0_i32_1 = arith.constant 0 : i32
    return %c0_i32, %c0_i32_0 : i32, i32
  }
  func.func @transform_2(%arg0: i32) -> (i32, i32) {
    %c0_i32 = arith.constant 0 : i32
    %c0_i32_0 = arith.constant 0 : i32
    return %arg0, %c0_i32 : i32, i32
  }
}

</mosaic_0001>

<llo_original>
// kernel: tpu_custom_call.1
$region0: #{tpu_custom_call.1}
  #allocation0 [shape = 'u32[]', space=smem, size = 0x4, offset = 0x4, fixed_abs, tag = 'smem constant byte address 0x4 - core index']
  #allocation1 [shape = 'u32[72,128]{1,0:T(1,128)}', space=vmem, size = 0x9000, scoped, tag = 'internal scratch']
  %s0 = inlined_call_operand.hbm [shape: f32[1,512], index: 0, kind: input, shape index: {}]
  %s1 = inlined_call_operand.hbm [shape: f32[1,512], index: 1, kind: input, shape index: {}]
  %s2 = inlined_call_operand.hbm [shape: f32[1,512], index: 2, kind: output, shape index: {}]
  %s3 = sld [smem:[#allocation0]]
  $region26: #{tpu_custom_call.1} parent=0
    _
  %s5 = ssub.s32 1, %s3
  %s6 = scalar_select 0, %s5, %s3
  $region1: #{tpu_custom_call.1} parent=0
    #allocation2 [shape = 'u8[2048]{0}', space=vmem, size = 0x800, scoped, tag = 'input window, operand 0, single buffered']
    #allocation3 [shape = 's32[1]{0}', space=sflag, size = 0x4, scoped, tag = 'scoped memory for tpu_custom_call.1']
    #allocation4 [shape = 's32[1]{0}', space=sflag, size = 0x4, scoped, tag = 'scoped memory for tpu_custom_call.1']
    #allocation5 [shape = 'u8[2048]{0}', space=vmem, size = 0x800, scoped, tag = 'input window, operand 1, single buffered']
    #allocation6 [shape = 's32[1]{0}', space=sflag, size = 0x4, scoped, tag = 'scoped memory for tpu_custom_call.1']
    #allocation7 [shape = 'u8[2048]{0}', space=vmem, size = 0x800, scoped, tag = 'output window, operand 0, single buffered']
    %7 = vsyncpa [#allocation3], 0
    %8 = vsyncpa [#allocation6], 0
    %9 = vsyncpa [#allocation4], 0
    // Predicated region
    $region2: #{tpu_custom_call.1} parent=1 // pred_check
      _
    $region3: #{tpu_custom_call.1} parent=1 // pred_check_branch
      %11 = sbr.rel (0) target = $region5
    $region4: #{tpu_custom_call.1} parent=1 // pred_region
      %13 = vsyncadd [#allocation3], 0
      %s15 = sshll.u32 %s0, 4
      %s16 = int_to_ptr.hbm [resolvable:$true] %s15
      %s17 = sshll.u32 [#allocation2], 4
      %s18 = int_to_ptr.vmem [resolvable:$true] %s17
      %20 = dma.hbm_to_vmem [thread:$0]  %s16, 64, %s18, [#allocation3]
    $region5: #{tpu_custom_call.1} parent=1 // pred_fallthru
      _
    // Predicated region
    $region6: #{tpu_custom_call.1} parent=1 // pred_check
      _
    $region7: #{tpu_custom_call.1} parent=1 // pred_check_branch
      %22 = sbr.rel (0) target = $region9
    $region8: #{tpu_custom_call.1} parent=1 // pred_region
      %24 = vsyncadd [#allocation6], 0
      %s26 = sshll.u32 %s1, 4
      %s27 = int_to_ptr.hbm [resolvable:$true] %s26
      %s28 = sshll.u32 [#allocation5], 4
      %s29 = int_to_ptr.vmem [resolvable:$true] %s28
      %31 = dma.hbm_to_vmem [thread:$0]  %s27, 64, %s29, [#allocation6]
    $region9: #{tpu_custom_call.1} parent=1 // pred_fallthru
      _
    // Predicated region
    $region10: #{tpu_custom_call.1} parent=1 // pred_check
      _
    $region11: #{tpu_custom_call.1} parent=1 // pred_check_branch
      %33 = sbr.rel (0) target = $region13
    $region12: #{tpu_custom_call.1} parent=1 // pred_region
      %35 = dma.done [#allocation3], 64
    $region13: #{tpu_custom_call.1} parent=1 // pred_fallthru
      _
    // Predicated region
    $region14: #{tpu_custom_call.1} parent=1 // pred_check
      _
    $region15: #{tpu_custom_call.1} parent=1 // pred_check_branch
      %37 = sbr.rel (0) target = $region17
    $region16: #{tpu_custom_call.1} parent=1 // pred_region
      %39 = dma.done [#allocation6], 64
    $region17: #{tpu_custom_call.1} parent=1 // pred_fallthru
      _
    %s40 = scvt.s32.f32 0
    %v41 = vld [vmem:[#allocation2] sm:$0xf]
    %v42 = vstv %s40
    %v43 = vmul.f32 %v42, %v41
    %v44 = vld [vmem:[#allocation5] sm:$0xf]
    %v45 = vadd.f32 %v43, %v44
    %v46 = vlaneseq
    %v47 = vshrl.u32 %v46, 7
    %v48 = vcvt.s32.f32 %v47
    %v50 = vperm.slane %v41, 0
    %v51 = vperm.slane %v41, 1
    %v52 = vperm.slane %v41, 2
    %v53 = vperm.slane %v41, 3
    %v58 = vmul.f32 %v48, %v50
    %v59 = vmul.f32 %v48, %v51
    %v60 = vmul.f32 %v48, %v52
    %v61 = vmul.f32 %v48, %v53
    %v63 = vperm.slane %v45, 0
    %v64 = vperm.slane %v45, 1
    %v65 = vperm.slane %v45, 2
    %v66 = vperm.slane %v45, 3
    %v71 = vadd.f32 %v58, %v63
    %v72 = vadd.f32 %v59, %v64
    %v73 = vadd.f32 %v60, %v65
    %v74 = vadd.f32 %v61, %v66
    %v79 = vrot.slane %v72, 7
    %v80 = vrot.slane %v73, 6
    %v81 = vrot.slane %v74, 5
    %vm82 = vcmask 1040384
    %v83 = vsel %vm82, %v71, %v79
    %vm84 = vcmask 1042434
    %v85 = vsel %vm84, %v80, %v81
    %vm86 = vcmask 1041408
    %v87 = vsel %vm86, %v83, %v85
    %v89 = vlaneseq
    %vm90 = vcmp.ge.s32.totalorder %v89, 0
    %vm91 = vcmp.lt.s32.totalorder %v89, 512
    %vm92 = vmand %vm90, %vm91
    %93 = vst.msk [vmem:[#allocation7] sm:$0xf] %vm92, %v87
    // Predicated region
    $region18: #{tpu_custom_call.1} parent=1 // pred_check
      _
    $region19: #{tpu_custom_call.1} parent=1 // pred_check_branch
      %95 = sbr.rel (0) target = $region21
    $region20: #{tpu_custom_call.1} parent=1 // pred_region
      %97 = vsyncadd [#allocation4], 0
      %s99 = sshll.u32 [#allocation7], 4
      %s100 = int_to_ptr.vmem [resolvable:$true] %s99
      %s101 = sshll.u32 %s2, 4
      %s102 = int_to_ptr.hbm [resolvable:$true] %s101
      %104 = dma.vmem_to_hbm [thread:$0]  %s100, 64, %s102, [#allocation4]
    $region21: #{tpu_custom_call.1} parent=1 // pred_fallthru
      _
    // Predicated region
    $region22: #{tpu_custom_call.1} parent=1 // pred_check
      _
    $region23: #{tpu_custom_call.1} parent=1 // pred_check_branch
      %106 = sbr.rel (0) target = $region25
    $region24: #{tpu_custom_call.1} parent=1 // pred_region
      %108 = dma.done [#allocation4], 64
    $region25: #{tpu_custom_call.1} parent=1 // pred_fallthru
      _
    %109 = vsyncpa [#allocation3], 1
    %110 = vsyncpa [#allocation6], 1
    %111 = vsyncpa [#allocation4], 1

</llo_original>
